<compile_context>
chip_gen: v5e
topology: v5e:2x2
jax: 0.10.0
libtpu: 0.0.40
codegen_flags: <defaults>
</compile_context>

<pallas_src>
import numpy as np
import jax
import jax.numpy as jnp
from jax.experimental import pallas as pl
from jax.experimental.pallas import tpu as pltpu


# ---------------------------------------------------------------------------
# Parameter construction (identical math to the PyTorch module's build()).
# ---------------------------------------------------------------------------
def hz2mel(hz):
    return 2595 * np.log10(1 + hz / 700.0)


def get_filterbanks(low_freq=20, high_freq=7600, nfilt=80, nfft=512, samplerate=16000):
    lowmel = hz2mel(low_freq)
    highmel = hz2mel(high_freq)
    melpoints = np.linspace(lowmel, highmel, nfilt + 2)
    lower_edge_mel = melpoints[:-2].reshape(1, -1)
    center_mel = melpoints[1:-1].reshape(1, -1)
    upper_edge_mel = melpoints[2:].reshape(1, -1)
    spectrogram_bins_mel = hz2mel(np.linspace(0, samplerate // 2, nfft))[1:].reshape(-1, 1)
    lower_slopes = (spectrogram_bins_mel - lower_edge_mel) / (center_mel - lower_edge_mel)
    upper_slopes = (upper_edge_mel - spectrogram_bins_mel) / (upper_edge_mel - center_mel)
    mel_weights_matrix = np.maximum(0.0, np.minimum(lower_slopes, upper_slopes))
    return np.vstack([np.zeros((1, nfilt)), mel_weights_matrix]).astype("float32")


def _round_up(x, m):
    return ((x + m - 1) // m) * m


def _cdiv(a, b):
    return (a + b - 1) // b


def build_params(frame_length=400, fft_length=512, num_bins=80, sample_rate=16000,
                 low_freq=20, high_freq=7600, window="hann"):
    """Builds the fused, kernel-ready constants (all numpy -> device once)."""
    nfft = fft_length
    if window in ("hann", "hanning"):
        win = np.array(
            [0.5 - 0.5 * np.cos(2 * np.pi * l / (frame_length - 1)) for l in range(frame_length)]
        ).astype("float32")
    else:
        win = np.ones(frame_length, dtype="float32")

    n = np.arange(nfft)
    real_kernel = np.cos(2 * np.pi * np.outer(n, n) / nfft).astype("float32")
    image_kernel = np.sin(2 * np.pi * np.outer(n, n) / nfft).astype("float32")
    wr = real_kernel[:frame_length, : nfft // 2] * win[:, None]      # (frame_length, nfft//2)
    wi = image_kernel[:frame_length, : nfft // 2] * win[:, None]     # (frame_length, nfft//2)

    mel = get_filterbanks(nfilt=num_bins, nfft=nfft // 2, samplerate=sample_rate,
                          low_freq=low_freq, high_freq=high_freq)    # (nfft//2, num_bins)

    # Pre-fused / pre-padded constants (hoisted out of the per-call path).
    w_fused = np.concatenate([wr, wi], axis=1)                       # (frame_length, nfft)
    lane_bins = _round_up(num_bins, 128)
    mel_padded = np.pad(mel, ((0, 0), (0, lane_bins - num_bins)))    # (nfft//2, lane_bins)
    return jnp.asarray(w_fused), jnp.asarray(mel_padded), num_bins


# ---------------------------------------------------------------------------
# Wrapper-side framing: strided reshape + static slices + concat (no gather).
# frames[n, l] = x_pad[b, t*frame_step + l]  for n = b*T + t.
# ---------------------------------------------------------------------------
def _frame_signal(x_pad, frame_length, frame_step):
    B, L_pad = x_pad.shape
    T = (L_pad - frame_length) // frame_step + 1
    n_chunks = _cdiv(frame_length, frame_step)
    S = T + n_chunks - 1
    target = S * frame_step
    if target > L_pad:
        x_pad = jnp.pad(x_pad, ((0, 0), (0, target - L_pad)))
    xs = x_pad[:, :target].reshape(B, S, frame_step)
    segs = []
    for j in range(n_chunks):
        w = min(frame_step, frame_length - j * frame_step)
        segs.append(xs[:, j:j + T, :w])
    frames = jnp.concatenate(segs, axis=2)                            # (B, T, frame_length)
    return frames.reshape(B * T, frame_length), T


# ---------------------------------------------------------------------------
# Pallas kernel: a tile of frames -> log-mel features.
#   frames_ref: (tile, frame_length)      f32
#   w_ref     : (frame_length, 2*nh)      f32   fused [wr | wi]
#   mel_ref   : (nh, lane_bins)           f32   mel matrix, lane-padded to 128
#   out_ref   : (tile, lane_bins)         f32
# ---------------------------------------------------------------------------
def _spectral_kernel(frames_ref, w_ref, mel_ref, out_ref, *, eps, nfft_half):
    f = frames_ref[...]                                               # (tile, frame_length)
    dft = jnp.dot(f, w_ref[...], preferred_element_type=jnp.float32)  # (tile, 2*nh)
    real = dft[:, :nfft_half]
    imag = dft[:, nfft_half:]
    power = real * real + imag * imag                                 # (tile, nh)
    power = jnp.clip(power, eps, 1.0 / eps)
    melsp = jnp.dot(power, mel_ref[...], preferred_element_type=jnp.float32)
    melsp = jnp.clip(melsp, eps, 1.0 / eps)
    out_ref[...] = jnp.log(melsp)                                     # (tile, lane_bins)


def spectral_features_tf(x, w_fused, mel_padded, num_bins=80, *, frame_length=400,
                         frame_step=160, eps=1e-8, max_tile=1024):
    """x: [B, L] or [B, 1, L] float signal. Returns [B, num_bins, T] log-mel (PyTorch NCT)."""
    in_dtype = x.dtype
    x = x.astype(jnp.float32)
    if x.ndim == 3:
        x = x[:, 0, :]
    B, _ = x.shape
    pad = frame_step // 2
    x_pad = jnp.pad(x, ((0, 0), (pad, pad)))

    frames, T = _frame_signal(x_pad, frame_length, frame_step)        # (N, frame_length)
    N = B * T

    nfft_half = w_fused.shape[1] // 2
    lane_bins = mel_padded.shape[1]

    # Adaptive M-tile: as big as reasonable, but >= 2 grid steps so both v7x TCs get work.
    tile = max(8, min(max_tile, _round_up(_cdiv(N, 2), 8)))
    num_tiles = _cdiv(N, tile)                                        # ragged last block OK

    flops = 2 * N * (frame_length * 2 * nfft_half + nfft_half * lane_bins)
    bytes_accessed = 4 * (N * frame_length + frame_length * 2 * nfft_half
                          + nfft_half * lane_bins + N * lane_bins)

    out = pl.pallas_call(
        lambda fr, w, m, o: _spectral_kernel(fr, w, m, o, eps=eps, nfft_half=nfft_half),
        out_shape=jax.ShapeDtypeStruct((N, lane_bins), jnp.float32),
        grid_spec=pltpu.PrefetchScalarGridSpec(
            num_scalar_prefetch=0,
            grid=(num_tiles,),
            in_specs=[
                pl.BlockSpec((tile, frame_length), lambda i: (i, 0)),
                pl.BlockSpec((frame_length, 2 * nfft_half), lambda i: (0, 0)),
                pl.BlockSpec((nfft_half, lane_bins), lambda i: (0, 0)),
            ],
            out_specs=pl.BlockSpec((tile, lane_bins), lambda i: (i, 0)),
        ),
        compiler_params=pltpu.CompilerParams(
            dimension_semantics=("parallel",),
            vmem_limit_bytes=32 * 1024 * 1024,
        ),
        cost_estimate=pl.CostEstimate(flops=flops, transcendentals=N * lane_bins,
                                      bytes_accessed=bytes_accessed),
    )(frames, w_fused, mel_padded)

    feat = out[:, :num_bins].reshape(B, T, num_bins)                  # (B, T, num_bins)
    feat = jnp.transpose(feat, (0, 2, 1))                             # (B, num_bins, T) NCT
    return feat.astype(in_dtype)


# ---------------------------------------------------------------------------
# Pure-JAX reference (mirrors the PyTorch forward) for a sanity check.
# ---------------------------------------------------------------------------
def _reference(x, wr, wi, mel, frame_length, frame_step, eps):
    x = x.astype(jnp.float32)
    B, L = x.shape
    pad = frame_step // 2
    x_pad = jnp.pad(x, ((0, 0), (pad, pad)))
    T = (L + 2 * pad - frame_length) // frame_step + 1
    idx = jnp.arange(T)[:, None] * frame_step + jnp.arange(frame_length)[None, :]
    frames = x_pad[:, idx]                                            # (B, T, frame_length)
    real = jnp.einsum("btl,lk->btk", frames, wr, precision=jax.lax.Precision.HIGHEST)
    imag = jnp.einsum("btl,lk->btk", frames, wi, precision=jax.lax.Precision.HIGHEST)
    power = jnp.clip(real ** 2 + imag ** 2, eps, 1.0 / eps)
    melsp = jnp.clip(jnp.einsum("btk,kn->btn", power, mel,
                                precision=jax.lax.Precision.HIGHEST), eps, 1.0 / eps)
    return jnp.transpose(jnp.log(melsp), (0, 2, 1))


if __name__ == "__main__":
    frame_length, frame_step, fft_length, num_bins = 400, 160, 512, 80
    eps = 1e-8

    w_fused, mel_padded, num_bins = build_params(frame_length=frame_length,
                                                 fft_length=fft_length, num_bins=num_bins)
    nfft_half = fft_length // 2
    wr_ref = w_fused[:, :nfft_half]
    wi_ref = w_fused[:, nfft_half:]
    mel_ref = mel_padded[:, :num_bins]

    key = jax.random.PRNGKey(0)
    k1, k2 = jax.random.split(key)

    # Case 1: small input: batch=2, 4000-sample signal -> T = 24 frames (N = 48).
    B1, L1 = 2, 4000
    x1 = jax.random.normal(k1, (B1, L1), dtype=jnp.float32)
    feat1 = spectral_features_tf(x1, w_fused, mel_padded, num_bins,
                                 frame_length=frame_length, frame_step=frame_step, eps=eps)
    feat1 = jax.block_until_ready(feat1)
    ref1 = _reference(x1, wr_ref, wi_ref, mel_ref, frame_length, frame_step, eps)
    T1 = (L1 + frame_step - frame_length) // frame_step + 1
    assert feat1.shape == (B1, num_bins, T1)
    np.testing.assert_allclose(np.asarray(feat1), np.asarray(ref1), rtol=2e-4, atol=2e-4)

    # Case 2: longer signal -> T = 300, N = 600 exercises multi-tile grid + ragged last block.
    B2, L2 = 2, 48080
    x2 = jax.random.normal(k2, (B2, L2), dtype=jnp.float32)
    feat2 = spectral_features_tf(x2, w_fused, mel_padded, num_bins,
                                 frame_length=frame_length, frame_step=frame_step, eps=eps)
    feat2 = jax.block_until_ready(feat2)
    ref2 = _reference(x2, wr_ref, wi_ref, mel_ref, frame_length, frame_step, eps)
    T2 = (L2 + frame_step - frame_length) // frame_step + 1
    assert feat2.shape == (B2, num_bins, T2)
    np.testing.assert_allclose(np.asarray(feat2), np.asarray(ref2), rtol=2e-4, atol=2e-4)

    print("KERNEL_OK")
</pallas_src>

<mosaic_0001>
module attributes {stable_mosaic.version = 11 : i64} {
  func.func @_lambda_(%arg0: i32, %arg1: memref<24x400xf32, #tpu.memory_space<vmem>>, %arg2: memref<400x512xf32, #tpu.memory_space<vmem>>, %arg3: memref<256x128xf32, #tpu.memory_space<vmem>>, %arg4: memref<24x128xf32, #tpu.memory_space<vmem>>) attributes {dimension_semantics = [#tpu.dimension_semantics<parallel>], iteration_bounds = array<i64: 2>, scalar_prefetch = 0 : i64, scratch_operands = 0 : i64, tpu.core_type = #tpu.core_type<tc>, window_params = [{transform_indices = @transform_0, window_bounds = array<i64: 24, 400>}, {pipeline_mode = #tpu.pipeline_mode<synchronous>, transform_indices = @transform_1, window_bounds = array<i64: 400, 512>}, {pipeline_mode = #tpu.pipeline_mode<synchronous>, transform_indices = @transform_2, window_bounds = array<i64: 256, 128>}, {transform_indices = @transform_3, window_bounds = array<i64: 24, 128>}]} {
    %c0 = arith.constant 0 : index
    %c0_0 = arith.constant 0 : index
    %0 = vector.load %arg1[%c0, %c0_0] : memref<24x400xf32, #tpu.memory_space<vmem>>, vector<24x400xf32>
    %c0_1 = arith.constant 0 : index
    %c0_2 = arith.constant 0 : index
    %1 = vector.load %arg2[%c0_1, %c0_2] : memref<400x512xf32, #tpu.memory_space<vmem>>, vector<400x512xf32>
    %cst = arith.constant dense<0.000000e+00> : vector<24x512xf32>
    %2 = tpu.matmul %0, %1, %cst {dimension_numbers = #tpu.dot_dimension_numbers<[1], [0], [0], [1], [0, 0, 1, 1], [], []>} : vector<24x400xf32>, vector<400x512xf32>, vector<24x512xf32> -> vector<24x512xf32>
    %3 = vector.extract_strided_slice %2 {offsets = [0, 0], sizes = [24, 256], strides = [1, 1]} : vector<24x512xf32> to vector<24x256xf32>
    %4 = vector.extract_strided_slice %2 {offsets = [0, 256], sizes = [24, 256], strides = [1, 1]} : vector<24x512xf32> to vector<24x256xf32>
    %5 = arith.mulf %3, %3 : vector<24x256xf32>
    %6 = arith.mulf %4, %4 : vector<24x256xf32>
    %7 = arith.addf %5, %6 : vector<24x256xf32>
    %cst_3 = arith.constant 9.99999993E-9 : f32
    %cst_4 = arith.constant 1.000000e+08 : f32
    %8 = vector.broadcast %cst_3 : f32 to vector<24x256xf32>
    %9 = arith.maximumf %8, %7 : vector<24x256xf32>
    %10 = vector.broadcast %cst_4 : f32 to vector<24x256xf32>
    %11 = arith.minimumf %10, %9 : vector<24x256xf32>
    %c0_5 = arith.constant 0 : index
    %c0_6 = arith.constant 0 : index
    %12 = vector.load %arg3[%c0_5, %c0_6] : memref<256x128xf32, #tpu.memory_space<vmem>>, vector<256x128xf32>
    %cst_7 = arith.constant dense<0.000000e+00> : vector<24x128xf32>
    %13 = tpu.matmul %11, %12, %cst_7 {dimension_numbers = #tpu.dot_dimension_numbers<[1], [0], [0], [1], [0, 0, 1, 1], [], []>} : vector<24x256xf32>, vector<256x128xf32>, vector<24x128xf32> -> vector<24x128xf32>
    %cst_8 = arith.constant 9.99999993E-9 : f32
    %cst_9 = arith.constant 1.000000e+08 : f32
    %14 = vector.broadcast %cst_8 : f32 to vector<24x128xf32>
    %15 = arith.maximumf %14, %13 : vector<24x128xf32>
    %16 = vector.broadcast %cst_9 : f32 to vector<24x128xf32>
    %17 = arith.minimumf %16, %15 : vector<24x128xf32>
    %18 = math.log %17 : vector<24x128xf32>
    %c0_10 = arith.constant 0 : index
    %c0_11 = arith.constant 0 : index
    %19 = vector.load %arg4[%c0_10, %c0_11] : memref<24x128xf32, #tpu.memory_space<vmem>>, vector<24x128xf32>
    tpu.vector_store %arg4[%c0_10, %c0_11], %18 {strides = array<i32>} : memref<24x128xf32, #tpu.memory_space<vmem>>, vector<24x128xf32>,
    return
  }
  func.func @transform_0(%arg0: i32) -> (i32, i32) {
    %c0_i32 = arith.constant 0 : i32
    %c0_i32_0 = arith.constant 0 : i32
    return %arg0, %c0_i32 : i32, i32
  }
  func.func @transform_1(%arg0: i32) -> (i32, i32) {
    %c0_i32 = arith.constant 0 : i32
    %c0_i32_0 = arith.constant 0 : i32
    %c0_i32_1 = arith.constant 0 : i32
    return %c0_i32, %c0_i32_0 : i32, i32
  }
  func.func @transform_2(%arg0: i32) -> (i32, i32) {
    %c0_i32 = arith.constant 0 : i32
    %c0_i32_0 = arith.constant 0 : i32
    %c0_i32_1 = arith.constant 0 : i32
    return %c0_i32, %c0_i32_0 : i32, i32
  }
  func.func @transform_3(%arg0: i32) -> (i32, i32) {
    %c0_i32 = arith.constant 0 : i32
    %c0_i32_0 = arith.constant 0 : i32
    return %arg0, %c0_i32 : i32, i32
  }
}

</mosaic_0001>

<llo_original>
// kernel: tpu_custom_call.1
$region0: #{tpu_custom_call.1}
  #allocation0 [shape = 'u32[]', space=smem, size = 0x4, offset = 0x4, fixed_abs, tag = 'smem constant byte address 0x4 - core index']
  #allocation1 [shape = 'u32[72,128]{1,0:T(1,128)}', space=vmem, size = 0x9000, scoped, tag = 'internal scratch']
  %s0 = inlined_call_operand.hbm [shape: f32[48,400], index: 0, kind: input, shape index: {}]
  %s1 = inlined_call_operand.hbm [shape: f32[400,512], index: 1, kind: input, shape index: {}]
  %s2 = inlined_call_operand.hbm [shape: f32[256,128], index: 2, kind: input, shape index: {}]
  %s3 = inlined_call_operand.hbm [shape: f32[48,128], index: 3, kind: output, shape index: {}]
  %s4 = sld [smem:[#allocation0]]
  $region57: #{tpu_custom_call.1} parent=0
    _
  %s6 = ssub.s32 1, %s4
  %s7 = scalar_select 0, %s6, %s4
  $region1: #{tpu_custom_call.1} parent=0
    #allocation2 [shape = 'u8[98304]{0}', space=vmem, size = 0x18000, scoped, tag = 'input window, operand 0']
    #allocation3 [shape = 's32[2]{0}', space=sflag, size = 0x8, scoped, tag = 'scoped memory for tpu_custom_call.1']
    #allocation4 [shape = 's32[2]{0}', space=sflag, size = 0x8, scoped, tag = 'scoped memory for tpu_custom_call.1']
    #allocation5 [shape = 'u8[819200]{0}', space=vmem, size = 0xc8000, scoped, tag = 'input window, operand 1, single buffered']
    #allocation6 [shape = 's32[1]{0}', space=sflag, size = 0x4, scoped, tag = 'scoped memory for tpu_custom_call.1']
    #allocation7 [shape = 'u8[131072]{0}', space=vmem, size = 0x20000, scoped, tag = 'input window, operand 2, single buffered']
    #allocation8 [shape = 'u8[24576]{0}', space=vmem, size = 0x6000, scoped, tag = 'output window, operand 0']
    %8 = vsyncpa [#allocation3], 0
    %s9 = scalar_lea.sflag [#allocation3], 1
    %10 = vsyncpa %s9, 0
    %11 = vsyncpa [#allocation6], 0
    %12 = vsyncpa [#allocation4], 0
    %s13 = scalar_lea.sflag [#allocation4], 1
    %14 = vsyncpa %s13, 0
    loop: start=0, step=1, limit=4
    $region2: #{tpu_custom_call.1} parent=1 // loop_pre_header
      _
    $region3: #{tpu_custom_call.1} parent=1 // loop_header
      %s16 = sphi 0, %s20
      %p17 = scmp.ge.s32.totalorder %s16, 4
      %s26 = sphi 0, %s28
      %s29 = sphi 0, %s26
      %s30 = sphi 0, %s29
      %s46 = sphi 0, %s30
      %s50 = sphi 0, %s50
      %s52 = sphi 0, %s50
      %s53 = sphi 0, %s52
      %s67 = sphi 0, %s53
      %s71 = sphi 0, %s71
      %s73 = sphi 0, %s71
      %s74 = sphi 0, %s73
      %s88 = sphi 0, %s74
      %s94 = sphi 0, %s96
      %s97 = sphi 0, %s94
      %s98 = sphi 0, %s97
      %s114 = sphi 0, %s98
    $region4: #{tpu_custom_call.1} parent=1 // loop_header_branch
      %19 = sbr.rel (%p17) target = $region8
    $region5: #{tpu_custom_call.1} parent=1 // loop_body
      %s21 = ssub.s32 %s16, 1
      %s22 = ssub.s32 %s16, 2
      %s23 = sadd.s32 %s16, 1
      %s24 = ssub.s32 %s16, %s23
      %p25 = scmp.eq.s32.totalorder %s24, 0
      %s27 = sadd.s32 %s26, 1
      %s28 = scalar_select %p25, %s26, %s27
      %p31 = pneg %p25
      %p32 = scmp.eq.s32.totalorder %s16, 1
      %p33 = por %p31, %p32
      %p34 = scmp.ne.s32.totalorder %s26, %s29
      %p35 = scmp.eq.s32.totalorder %s16, 0
      %p36 = por %p34, %p35
      %p37 = scmp.ne.s32.totalorder %s26, %s29
      %p38 = scmp.eq.s32.totalorder %s21, 1
      %p39 = por %p37, %p38
      %p40 = scmp.ne.s32.totalorder %s29, %s30
      %p41 = scmp.eq.s32.totalorder %s21, 0
      %p42 = por %p40, %p41
      %p43 = scmp.ne.s32.totalorder %s29, %s30
      %p44 = scmp.eq.s32.totalorder %s22, 1
      %p45 = por %p43, %p44
      %p47 = scmp.ne.s32.totalorder %s30, %s46
      %p48 = scmp.eq.s32.totalorder %s22, 0
      %p49 = por %p47, %p48
      %s51 = sadd.s32 %s50, 1
      %p54 = scmp.eq.s32.totalorder %s16, 1
      %p55 = scmp.ne.s32.totalorder %s50, %s52
      %p56 = scmp.eq.s32.totalorder %s16, 0
      %p57 = por %p55, %p56
      %p58 = scmp.ne.s32.totalorder %s50, %s52
      %p59 = scmp.eq.s32.totalorder %s21, 1
      %p60 = por %p58, %p59
      %p61 = scmp.ne.s32.totalorder %s52, %s53
      %p62 = scmp.eq.s32.totalorder %s21, 0
      %p63 = por %p61, %p62
      %p64 = scmp.ne.s32.totalorder %s52, %s53
      %p65 = scmp.eq.s32.totalorder %s22, 1
      %p66 = por %p64, %p65
      %p68 = scmp.ne.s32.totalorder %s53, %s67
      %p69 = scmp.eq.s32.totalorder %s22, 0
      %p70 = por %p68, %p69
      %s72 = sadd.s32 %s71, 1
      %p75 = scmp.eq.s32.totalorder %s16, 1
      %p76 = scmp.ne.s32.totalorder %s71, %s73
      %p77 = scmp.eq.s32.totalorder %s16, 0
      %p78 = por %p76, %p77
      %p79 = scmp.ne.s32.totalorder %s71, %s73
      %p80 = scmp.eq.s32.totalorder %s21, 1
      %p81 = por %p79, %p80
      %p82 = scmp.ne.s32.totalorder %s73, %s74
      %p83 = scmp.eq.s32.totalorder %s21, 0
      %p84 = por %p82, %p83
      %p85 = scmp.ne.s32.totalorder %s73, %s74
      %p86 = scmp.eq.s32.totalorder %s22, 1
      %p87 = por %p85, %p86
      %p89 = scmp.ne.s32.totalorder %s74, %s88
      %p90 = scmp.eq.s32.totalorder %s22, 0
      %p91 = por %p89, %p90
      %s92 = ssub.s32 %s16, %s23
      %p93 = scmp.eq.s32.totalorder %s92, 0
      %s95 = sadd.s32 %s94, 1
      %s96 = scalar_select %p93, %s94, %s95
      %p99 = pneg %p93
      %p100 = scmp.eq.s32.totalorder %s16, 1
      %p101 = por %p99, %p100
      %p102 = scmp.ne.s32.totalorder %s94, %s97
      %p103 = scmp.eq.s32.totalorder %s16, 0
      %p104 = por %p102, %p103
      %p105 = scmp.ne.s32.totalorder %s94, %s97
      %p106 = scmp.eq.s32.totalorder %s21, 1
      %p107 = por %p105, %p106
      %p108 = scmp.ne.s32.totalorder %s97, %s98
      %p109 = scmp.eq.s32.totalorder %s21, 0
      %p110 = por %p108, %p109
      %p111 = scmp.ne.s32.totalorder %s97, %s98
      %p112 = scmp.eq.s32.totalorder %s22, 1
      %p113 = por %p111, %p112
      %p115 = scmp.ne.s32.totalorder %s98, %s114
      %p116 = scmp.eq.s32.totalorder %s22, 0
      %p117 = por %p115, %p116
      %p118 = scmp.le.s32.totalorder 1, %s16
      %p119 = scmp.lt.s32.totalorder %s16, 3
      %p120 = pnand %p118, %p119
      %p121 = pneg %p120
      // Predicated region
      $region9: #{tpu_custom_call.1} parent=5 // pred_check
        _
      $region10: #{tpu_custom_call.1} parent=5 // pred_check_branch
        %123 = sbr.rel (%p120) target = $region12
      $region11: #{tpu_custom_call.1} parent=5 // pred_region
        %s124 = ssub.s32 %s16, 1
        // Predicated region
        $region13: #{tpu_custom_call.1} parent=11 // pred_check
          %p125 = pneg %p63
        $region14: #{tpu_custom_call.1} parent=11 // pred_check_branch
          %127 = sbr.rel (%p125) target = $region16
        $region15: #{tpu_custom_call.1} parent=11 // pred_region
          %129 = vsyncadd [#allocation6], 0
          %s130 = sshll.u32 %s1, 4
          %s131 = int_to_ptr.hbm [resolvable:$true] %s130
          %s132 = sshll.u32 [#allocation5], 4
          %s133 = int_to_ptr.vmem [resolvable:$true] %s132
          %138 = dma.hbm_to_vmem [thread:$0]  %s131, 25600, %s133, [#allocation6], 512, 512, 32
        $region16: #{tpu_custom_call.1} parent=11 // pred_fallthru
          _
        // Predicated region
        $region17: #{tpu_custom_call.1} parent=11 // pred_check
          %p139 = pneg %p84
        $region18: #{tpu_custom_call.1} parent=11 // pred_check_branch
          %141 = sbr.rel (%p139) target = $region20
        $region19: #{tpu_custom_call.1} parent=11 // pred_region
          %143 = vsyncadd [#allocation6], 0
          %s144 = sshll.u32 %s2, 4
          %s145 = int_to_ptr.hbm [resolvable:$true] %s144
          %s146 = sshll.u32 [#allocation7], 4
          %s147 = int_to_ptr.vmem [resolvable:$true] %s146
          %152 = dma.hbm_to_vmem [thread:$0]  %s145, 4096, %s147, [#allocation6], 128, 128, 8
        $region20: #{tpu_custom_call.1} parent=11 // pred_fallthru
          _
      $region12: #{tpu_custom_call.1} parent=5 // pred_fallthru
        _
      %p153 = scmp.lt.s32.totalorder %s16, 2
      // Predicated region
      $region21: #{tpu_custom_call.1} parent=5 // pred_check
        %p154 = pneg %p153
      $region22: #{tpu_custom_call.1} parent=5 // pred_check_branch
        %156 = sbr.rel (%p154) target = $region24
      $region23: #{tpu_custom_call.1} parent=5 // pred_region
        // Predicated region
        $region25: #{tpu_custom_call.1} parent=23 // pred_check
          %p157 = pneg %p36
        $region26: #{tpu_custom_call.1} parent=23 // pred_check_branch
          %159 = sbr.rel (%p157) target = $region28
        $region27: #{tpu_custom_call.1} parent=23 // pred_region
          %s160 = sand.u32 %s26, 1
          %s161 = scalar_lea.sflag [#allocation3], %s160
          %s162 = sand.u32 %s26, 1
          %s163 = smul.addr %s162, 96
          %s164 = scalar_lea.vmem [#allocation2], %s163
          %s165 = smul.u32 3, %s16
          %167 = vsyncadd %s161, 0
          %s168 = smul.addr %s165, 4
          %s169 = smul.addr %s168, 8
          %s170 = scalar_lea.hbm %s0, %s169
          %s171 = sshll.u32 %s170, 4
          %s172 = int_to_ptr.hbm [resolvable:$true] %s171
          %s173 = sshll.u32 %s164, 4
          %s174 = int_to_ptr.vmem [resolvable:$true] %s173
          %179 = dma.hbm_to_vmem [thread:$0]  %s172, 1536, %s174, %s161, 512, 512, 32
        $region28: #{tpu_custom_call.1} parent=23 // pred_fallthru
          _
      $region24: #{tpu_custom_call.1} parent=5 // pred_fallthru
        _
      %p180 = scmp.le.s32.totalorder 1, %s16
      %p181 = scmp.lt.s32.totalorder %s16, 3
      %p182 = pnand %p180, %p181
      %p183 = pneg %p182
      // Predicated region
      $region29: #{tpu_custom_call.1} parent=5 // pred_check
        _
      $region30: #{tpu_custom_call.1} parent=5 // pred_check_branch
        %185 = sbr.rel (%p182) target = $region32
      $region31: #{tpu_custom_call.1} parent=5 // pred_region
        %s186 = ssub.s32 %s16, 1
        %s187 = sand.u32 %s29, 1
        %s188 = scalar_lea.sflag [#allocation3], %s187
        %s189 = sand.u32 %s29, 1
        %s190 = smul.addr %s189, 96
        %s191 = scalar_lea.vmem [#allocation2], %s190
        // Predicated region
        $region33: #{tpu_custom_call.1} parent=31 // pred_check
          %p192 = pneg %p42
        $region34: #{tpu_custom_call.1} parent=31 // pred_check_branch
          %194 = sbr.rel (%p192) target = $region36
        $region35: #{tpu_custom_call.1} parent=31 // pred_region
          %196 = dma.done %s188, 1536
        $region36: #{tpu_custom_call.1} parent=31 // pred_fallthru
          _
        // Predicated region
        $region37: #{tpu_custom_call.1} parent=31 // pred_check
          %p197 = pneg %p63
        $region38: #{tpu_custom_call.1} parent=31 // pred_check_branch
          %199 = sbr.rel (%p197) target = $region40
        $region39: #{tpu_custom_call.1} parent=31 // pred_region
          %201 = dma.done [#allocation6], 25600
        $region40: #{tpu_custom_call.1} parent=31 // pred_fallthru
          _
        // Predicated region
        $region41: #{tpu_custom_call.1} parent=31 // pred_check
          %p202 = pneg %p84
        $region42: #{tpu_custom_call.1} parent=31 // pred_check_branch
          %204 = sbr.rel (%p202) target = $region44
        $region43: #{tpu_custom_call.1} parent=31 // pred_region
          %206 = dma.done [#allocation6], 4096
        $region44: #{tpu_custom_call.1} parent=31 // pred_fallthru
          _
        %s207 = sand.u32 %s29, 1
        %s208 = scalar_lea.sflag [#allocation3], %s207
        %s209 = sand.u32 %s29, 1
        %s210 = smul.addr %s209, 96
        %s211 = scalar_lea.vmem [#allocation2], %s210
        %p212 = pneg %p42
        %p213 = pneg %p39
        %p214 = pneg %p63
        %p215 = pneg %p60
        %p216 = pneg %p84
        %p217 = pneg %p81
        %p218 = pneg %p110
        %p219 = pneg %p107
        %s220 = sand.u32 %s97, 1
        %s221 = scalar_lea.sflag [#allocation4], %s220
        %s222 = sand.u32 %s97, 1
        %s223 = smul.addr %s222, 24
        %s224 = scalar_lea.vmem [#allocation8], %s223
        %s225 = smul.u32 3, %s21
        %s226 = smul.u32 3, %s21
        %v227 = vld [vmem:[%s191] sm:$0xff]
        %v228 = vld [vmem:[%s191 + $0x8] sm:$0xff]
        %v229 = vld [vmem:[%s191 + $0x10] sm:$0xff]
        %v230 = vld [vmem:[%s191 + $0x18] sm:$0xff]
        %v231 = vld [vmem:[%s191 + $0x20] sm:$0xff]
        %v232 = vld [vmem:[%s191 + $0x28] sm:$0xff]
        %v233 = vld [vmem:[%s191 + $0x30] sm:$0xff]
        %v234 = vld [vmem:[%s191 + $0x38] sm:$0xff]
        %v235 = vld [vmem:[%s191 + $0x40] sm:$0xff]
        %v236 = vld [vmem:[%s191 + $0x48] sm:$0xff]
        %v237 = vld [vmem:[%s191 + $0x50] sm:$0xff]
        %v238 = vld [vmem:[%s191 + $0x58] sm:$0xff]
        %v239 = vld [vmem:[#allocation5] sm:$0xff]
        %v240 = vld [vmem:[#allocation5 + $0x8] sm:$0xff]
        %v241 = vld [vmem:[#allocation5 + $0x10] sm:$0xff]
        %v242 = vld [vmem:[#allocation5 + $0x18] sm:$0xff]
        %v243 = vld [vmem:[#allocation5 + $0x20] sm:$0xff]
        %v244 = vld [vmem:[#allocation5 + $0x28] sm:$0xff]
        %v245 = vld [vmem:[#allocation5 + $0x30] sm:$0xff]
        %v246 = vld [vmem:[#allocation5 + $0x38] sm:$0xff]
        %v247 = vld [vmem:[#allocation5 + $0x40] sm:$0xff]
        %v248 = vld [vmem:[#allocation5 + $0x48] sm:$0xff]
        %v249 = vld [vmem:[#allocation5 + $0x50] sm:$0xff]
        %v250 = vld [vmem:[#allocation5 + $0x58] sm:$0xff]
        %v251 = vld [vmem:[#allocation5 + $0x60] sm:$0xff]
        %v252 = vld [vmem:[#allocation5 + $0x68] sm:$0xff]
        %v253 = vld [vmem:[#allocation5 + $0x70] sm:$0xff]
        %v254 = vld [vmem:[#allocation5 + $0x78] sm:$0xff]
        %v255 = vld [vmem:[#allocation5 + $0x80] sm:$0xff]
        %v256 = vld [vmem:[#allocation5 + $0x88] sm:$0xff]
        %v257 = vld [vmem:[#allocation5 + $0x90] sm:$0xff]
        %v258 = vld [vmem:[#allocation5 + $0x98] sm:$0xff]
        %v259 = vld [vmem:[#allocation5 + $0xa0] sm:$0xff]
        %v260 = vld [vmem:[#allocation5 + $0xa8] sm:$0xff]
        %v261 = vld [vmem:[#allocation5 + $0xb0] sm:$0xff]
        %v262 = vld [vmem:[#allocation5 + $0xb8] sm:$0xff]
        %v263 = vld [vmem:[#allocation5 + $0xc0] sm:$0xff]
        %v264 = vld [vmem:[#allocation5 + $0xc8] sm:$0xff]
        %v265 = vld [vmem:[#allocation5 + $0xd0] sm:$0xff]
        %v266 = vld [vmem:[#allocation5 + $0xd8] sm:$0xff]
        %v267 = vld [vmem:[#allocation5 + $0xe0] sm:$0xff]
        %v268 = vld [vmem:[#allocation5 + $0xe8] sm:$0xff]
        %v269 = vld [vmem:[#allocation5 + $0xf0] sm:$0xff]
        %v270 = vld [vmem:[#allocation5 + $0xf8] sm:$0xff]
        %v271 = vld [vmem:[#allocation5 + $0x100] sm:$0xff]
        %v272 = vld [vmem:[#allocation5 + $0x108] sm:$0xff]
        %v273 = vld [vmem:[#allocation5 + $0x110] sm:$0xff]
        %v274 = vld [vmem:[#allocation5 + $0x118] sm:$0xff]
        %v275 = vld [vmem:[#allocation5 + $0x120] sm:$0xff]
        %v276 = vld [vmem:[#allocation5 + $0x128] sm:$0xff]
        %v277 = vld [vmem:[#allocation5 + $0x130] sm:$0xff]
        %v278 = vld [vmem:[#allocation5 + $0x138] sm:$0xff]
        %v279 = vld [vmem:[#allocation5 + $0x140] sm:$0xff]
        %v280 = vld [vmem:[#allocation5 + $0x148] sm:$0xff]
        %v281 = vld [vmem:[#allocation5 + $0x150] sm:$0xff]
        %v282 = vld [vmem:[#allocation5 + $0x158] sm:$0xff]
        %v283 = vld [vmem:[#allocation5 + $0x160] sm:$0xff]
        %v284 = vld [vmem:[#allocation5 + $0x168] sm:$0xff]
        %v285 = vld [vmem:[#allocation5 + $0x170] sm:$0xff]
        %v286 = vld [vmem:[#allocation5 + $0x178] sm:$0xff]
        %v287 = vld [vmem:[#allocation5 + $0x180] sm:$0xff]
        %v288 = vld [vmem:[#allocation5 + $0x188] sm:$0xff]
        %v289 = vld [vmem:[#allocation5 + $0x190] sm:$0xff]
        %v290 = vld [vmem:[#allocation5 + $0x198] sm:$0xff]
        %v291 = vld [vmem:[#allocation5 + $0x1a0] sm:$0xff]
        %v292 = vld [vmem:[#allocation5 + $0x1a8] sm:$0xff]
        %v293 = vld [vmem:[#allocation5 + $0x1b0] sm:$0xff]
        %v294 = vld [vmem:[#allocation5 + $0x1b8] sm:$0xff]
        %v295 = vld [vmem:[#allocation5 + $0x1c0] sm:$0xff]
        %v296 = vld [vmem:[#allocation5 + $0x1c8] sm:$0xff]
        %v297 = vld [vmem:[#allocation5 + $0x1d0] sm:$0xff]
        %v298 = vld [vmem:[#allocation5 + $0x1d8] sm:$0xff]
        %v299 = vld [vmem:[#allocation5 + $0x1e0] sm:$0xff]
        %v300 = vld [vmem:[#allocation5 + $0x1e8] sm:$0xff]
        %v301 = vld [vmem:[#allocation5 + $0x1f0] sm:$0xff]
        %v302 = vld [vmem:[#allocation5 + $0x1f8] sm:$0xff]
        %v303 = vld [vmem:[#allocation5 + $0x200] sm:$0xff]
        %v304 = vld [vmem:[#allocation5 + $0x208] sm:$0xff]
        %v305 = vld [vmem:[#allocation5 + $0x210] sm:$0xff]
        %v306 = vld [vmem:[#allocation5 + $0x218] sm:$0xff]
        %v307 = vld [vmem:[#allocation5 + $0x220] sm:$0xff]
        %v308 = vld [vmem:[#allocation5 + $0x228] sm:$0xff]
        %v309 = vld [vmem:[#allocation5 + $0x230] sm:$0xff]
        %v310 = vld [vmem:[#allocation5 + $0x238] sm:$0xff]
        %v311 = vld [vmem:[#allocation5 + $0x240] sm:$0xff]
        %v312 = vld [vmem:[#allocation5 + $0x248] sm:$0xff]
        %v313 = vld [vmem:[#allocation5 + $0x250] sm:$0xff]
        %v314 = vld [vmem:[#allocation5 + $0x258] sm:$0xff]
        %v315 = vld [vmem:[#allocation5 + $0x260] sm:$0xff]
        %v316 = vld [vmem:[#allocation5 + $0x268] sm:$0xff]
        %v317 = vld [vmem:[#allocation5 + $0x270] sm:$0xff]
        %v318 = vld [vmem:[#allocation5 + $0x278] sm:$0xff]
        %v319 = vld [vmem:[#allocation5 + $0x280] sm:$0xff]
        %v320 = vld [vmem:[#allocation5 + $0x288] sm:$0xff]
        %v321 = vld [vmem:[#allocation5 + $0x290] sm:$0xff]
        %v322 = vld [vmem:[#allocation5 + $0x298] sm:$0xff]
        %v323 = vld [vmem:[#allocation5 + $0x2a0] sm:$0xff]
        %v324 = vld [vmem:[#allocation5 + $0x2a8] sm:$0xff]
        %v325 = vld [vmem:[#allocation5 + $0x2b0] sm:$0xff]
        %v326 = vld [vmem:[#allocation5 + $0x2b8] sm:$0xff]
        %v327 = vld [vmem:[#allocation5 + $0x2c0] sm:$0xff]
        %v328 = vld [vmem:[#allocation5 + $0x2c8] sm:$0xff]
        %v329 = vld [vmem:[#allocation5 + $0x2d0] sm:$0xff]
        %v330 = vld [vmem:[#allocation5 + $0x2d8] sm:$0xff]
        %v331 = vld [vmem:[#allocation5 + $0x2e0] sm:$0xff]
        %v332 = vld [vmem:[#allocation5 + $0x2e8] sm:$0xff]
        %v333 = vld [vmem:[#allocation5 + $0x2f0] sm:$0xff]
        %v334 = vld [vmem:[#allocation5 + $0x2f8] sm:$0xff]
        %v335 = vld [vmem:[#allocation5 + $0x300] sm:$0xff]
        %v336 = vld [vmem:[#allocation5 + $0x308] sm:$0xff]
        %v337 = vld [vmem:[#allocation5 + $0x310] sm:$0xff]
        %v338 = vld [vmem:[#allocation5 + $0x318] sm:$0xff]
        %v339 = vld [vmem:[#allocation5 + $0x320] sm:$0xff]
        %v340 = vld [vmem:[#allocation5 + $0x328] sm:$0xff]
        %v341 = vld [vmem:[#allocation5 + $0x330] sm:$0xff]
        %v342 = vld [vmem:[#allocation5 + $0x338] sm:$0xff]
        %v343 = vld [vmem:[#allocation5 + $0x340] sm:$0xff]
        %v344 = vld [vmem:[#allocation5 + $0x348] sm:$0xff]
        %v345 = vld [vmem:[#allocation5 + $0x350] sm:$0xff]
        %v346 = vld [vmem:[#allocation5 + $0x358] sm:$0xff]
        %v347 = vld [vmem:[#allocation5 + $0x360] sm:$0xff]
        %v348 = vld [vmem:[#allocation5 + $0x368] sm:$0xff]
        %v349 = vld [vmem:[#allocation5 + $0x370] sm:$0xff]
        %v350 = vld [vmem:[#allocation5 + $0x378] sm:$0xff]
        %v351 = vld [vmem:[#allocation5 + $0x380] sm:$0xff]
        %v352 = vld [vmem:[#allocation5 + $0x388] sm:$0xff]
        %v353 = vld [vmem:[#allocation5 + $0x390] sm:$0xff]
        %v354 = vld [vmem:[#allocation5 + $0x398] sm:$0xff]
        %v355 = vld [vmem:[#allocation5 + $0x3a0] sm:$0xff]
        %v356 = vld [vmem:[#allocation5 + $0x3a8] sm:$0xff]
        %v357 = vld [vmem:[#allocation5 + $0x3b0] sm:$0xff]
        %v358 = vld [vmem:[#allocation5 + $0x3b8] sm:$0xff]
        %v359 = vld [vmem:[#allocation5 + $0x3c0] sm:$0xff]
        %v360 = vld [vmem:[#allocation5 + $0x3c8] sm:$0xff]
        %v361 = vld [vmem:[#allocation5 + $0x3d0] sm:$0xff]
        %v362 = vld [vmem:[#allocation5 + $0x3d8] sm:$0xff]
        %v363 = vld [vmem:[#allocation5 + $0x3e0] sm:$0xff]
        %v364 = vld [vmem:[#allocation5 + $0x3e8] sm:$0xff]
        %v365 = vld [vmem:[#allocation5 + $0x3f0] sm:$0xff]
        %v366 = vld [vmem:[#allocation5 + $0x3f8] sm:$0xff]
        %v367 = vld [vmem:[#allocation5 + $0x400] sm:$0xff]
        %v368 = vld [vmem:[#allocation5 + $0x408] sm:$0xff]
        %v369 = vld [vmem:[#allocation5 + $0x410] sm:$0xff]
        %v370 = vld [vmem:[#allocation5 + $0x418] sm:$0xff]
        %v371 = vld [vmem:[#allocation5 + $0x420] sm:$0xff]
        %v372 = vld [vmem:[#allocation5 + $0x428] sm:$0xff]
        %v373 = vld [vmem:[#allocation5 + $0x430] sm:$0xff]
        %v374 = vld [vmem:[#allocation5 + $0x438] sm:$0xff]
        %v375 = vld [vmem:[#allocation5 + $0x440] sm:$0xff]
        %v376 = vld [vmem:[#allocation5 + $0x448] sm:$0xff]
        %v377 = vld [vmem:[#allocation5 + $0x450] sm:$0xff]
        %v378 = vld [vmem:[#allocation5 + $0x458] sm:$0xff]
        %v379 = vld [vmem:[#allocation5 + $0x460] sm:$0xff]
        %v380 = vld [vmem:[#allocation5 + $0x468] sm:$0xff]
        %v381 = vld [vmem:[#allocation5 + $0x470] sm:$0xff]
        %v382 = vld [vmem:[#allocation5 + $0x478] sm:$0xff]
        %v383 = vld [vmem:[#allocation5 + $0x480] sm:$0xff]
        %v384 = vld [vmem:[#allocation5 + $0x488] sm:$0xff]
        %v385 = vld [vmem:[#allocation5 + $0x490] sm:$0xff]
        %v386 = vld [vmem:[#allocation5 + $0x498] sm:$0xff]
        %v387 = vld [vmem:[#allocation5 + $0x4a0] sm:$0xff]
        %v388 = vld [vmem:[#allocation5 + $0x4a8] sm:$0xff]
        %v389 = vld [vmem:[#allocation5 + $0x4b0] sm:$0xff]
        %v390 = vld [vmem:[#allocation5 + $0x4b8] sm:$0xff]
        %v391 = vld [vmem:[#allocation5 + $0x4c0] sm:$0xff]
        %v392 = vld [vmem:[#allocation5 + $0x4c8] sm:$0xff]
        %v393 = vld [vmem:[#allocation5 + $0x4d0] sm:$0xff]
        %v394 = vld [vmem:[#allocation5 + $0x4d8] sm:$0xff]
        %v395 = vld [vmem:[#allocation5 + $0x4e0] sm:$0xff]
        %v396 = vld [vmem:[#allocation5 + $0x4e8] sm:$0xff]
        %v397 = vld [vmem:[#allocation5 + $0x4f0] sm:$0xff]
        %v398 = vld [vmem:[#allocation5 + $0x4f8] sm:$0xff]
        %v399 = vld [vmem:[#allocation5 + $0x500] sm:$0xff]
        %v400 = vld [vmem:[#allocation5 + $0x508] sm:$0xff]
        %v401 = vld [vmem:[#allocation5 + $0x510] sm:$0xff]
        %v402 = vld [vmem:[#allocation5 + $0x518] sm:$0xff]
        %v403 = vld [vmem:[#allocation5 + $0x520] sm:$0xff]
        %v404 = vld [vmem:[#allocation5 + $0x528] sm:$0xff]
        %v405 = vld [vmem:[#allocation5 + $0x530] sm:$0xff]
        %v406 = vld [vmem:[#allocation5 + $0x538] sm:$0xff]
        %v407 = vld [vmem:[#allocation5 + $0x540] sm:$0xff]
        %v408 = vld [vmem:[#allocation5 + $0x548] sm:$0xff]
        %v409 = vld [vmem:[#allocation5 + $0x550] sm:$0xff]
        %v410 = vld [vmem:[#allocation5 + $0x558] sm:$0xff]
        %v411 = vld [vmem:[#allocation5 + $0x560] sm:$0xff]
        %v412 = vld [vmem:[#allocation5 + $0x568] sm:$0xff]
        %v413 = vld [vmem:[#allocation5 + $0x570] sm:$0xff]
        %v414 = vld [vmem:[#allocation5 + $0x578] sm:$0xff]
        %v415 = vld [vmem:[#allocation5 + $0x580] sm:$0xff]
        %v416 = vld [vmem:[#allocation5 + $0x588] sm:$0xff]
        %v417 = vld [vmem:[#allocation5 + $0x590] sm:$0xff]
        %v418 = vld [vmem:[#allocation5 + $0x598] sm:$0xff]
        %v419 = vld [vmem:[#allocation5 + $0x5a0] sm:$0xff]
        %v420 = vld [vmem:[#allocation5 + $0x5a8] sm:$0xff]
        %v421 = vld [vmem:[#allocation5 + $0x5b0] sm:$0xff]
        %v422 = vld [vmem:[#allocation5 + $0x5b8] sm:$0xff]
        %v423 = vld [vmem:[#allocation5 + $0x5c0] sm:$0xff]
        %v424 = vld [vmem:[#allocation5 + $0x5c8] sm:$0xff]
        %v425 = vld [vmem:[#allocation5 + $0x5d0] sm:$0xff]
        %v426 = vld [vmem:[#allocation5 + $0x5d8] sm:$0xff]
        %v427 = vld [vmem:[#allocation5 + $0x5e0] sm:$0xff]
        %v428 = vld [vmem:[#allocation5 + $0x5e8] sm:$0xff]
        %v429 = vld [vmem:[#allocation5 + $0x5f0] sm:$0xff]
        %v430 = vld [vmem:[#allocation5 + $0x5f8] sm:$0xff]
        %v431 = vld [vmem:[#allocation5 + $0x600] sm:$0xff]
        %v432 = vld [vmem:[#allocation5 + $0x608] sm:$0xff]
        %v433 = vld [vmem:[#allocation5 + $0x610] sm:$0xff]
        %v434 = vld [vmem:[#allocation5 + $0x618] sm:$0xff]
        %v435 = vld [vmem:[#allocation5 + $0x620] sm:$0xff]
        %v436 = vld [vmem:[#allocation5 + $0x628] sm:$0xff]
        %v437 = vld [vmem:[#allocation5 + $0x630] sm:$0xff]
        %v438 = vld [vmem:[#allocation5 + $0x638] sm:$0xff]
        %vm439 = vcmask 130048
        %v441 = vsel %vm439, %v230, 0
        %v444 = vsel %vm439, %v234, 0
        %v447 = vsel %vm439, %v238, 0
        %449 = vmatpush.msra.mxu0 %v299
        %450 = vmatpush.msra.mxu0 %v295
        %451 = vmatpush.msra.mxu0 %v291
        %452 = vmatpush.msra.mxu0 %v287
        %453 = vmatpush.msra.mxu0 %v283
        %454 = vmatpush.msra.mxu0 %v279
        %455 = vmatpush.msra.mxu0 %v275
        %456 = vmatpush.msra.mxu0 %v271
        %457 = vmatpush.msra.mxu0 %v267
        %458 = vmatpush.msra.mxu0 %v263
        %459 = vmatpush.msra.mxu0 %v259
        %460 = vmatpush.msra.mxu0 %v255
        %461 = vmatpush.msra.mxu0 %v251
        %462 = vmatpush.msra.mxu0 %v247
        %463 = vmatpush.msra.mxu0 %v243
        %464 = vmatpush.msra.mxu0 %v239
        %465 = vmatmul.f32.gmra.mxu0 %v227
        %v466 = vpop.f32.mrf.mxu0
        %v467 = vadd.f32 0.0, %v466
        %468 = vmatmul.f32.gmra.mxu0 %v231
        %v469 = vpop.f32.mrf.mxu0
        %v470 = vadd.f32 0.0, %v469
        %471 = vmatmul.f32.gmra.mxu0 %v235
        %v472 = vpop.f32.mrf.mxu0
        %v473 = vadd.f32 0.0, %v472
        %474 = vdwg.mxu0
        %475 = vmatpush.msra.mxu0 %v363
        %476 = vmatpush.msra.mxu0 %v359
        %477 = vmatpush.msra.mxu0 %v355
        %478 = vmatpush.msra.mxu0 %v351
        %479 = vmatpush.msra.mxu0 %v347
        %480 = vmatpush.msra.mxu0 %v343
        %481 = vmatpush.msra.mxu0 %v339
        %482 = vmatpush.msra.mxu0 %v335
        %483 = vmatpush.msra.mxu0 %v331
        %484 = vmatpush.msra.mxu0 %v327
        %485 = vmatpush.msra.mxu0 %v323
        %486 = vmatpush.msra.mxu0 %v319
        %487 = vmatpush.msra.mxu0 %v315
        %488 = vmatpush.msra.mxu0 %v311
        %489 = vmatpush.msra.mxu0 %v307
        %490 = vmatpush.msra.mxu0 %v303
        %491 = vmatmul.f32.gmra.mxu0 %v228
        %v492 = vpop.f32.mrf.mxu0
        %v493 = vadd.f32 %v467, %v492
        %494 = vmatmul.f32.gmra.mxu0 %v232
        %v495 = vpop.f32.mrf.mxu0
        %v496 = vadd.f32 %v470, %v495
        %497 = vmatmul.f32.gmra.mxu0 %v236
        %v498 = vpop.f32.mrf.mxu0
        %v499 = vadd.f32 %v473, %v498
        %500 = vdwg.mxu0
        %501 = vmatpush.msra.mxu0 %v427
        %502 = vmatpush.msra.mxu0 %v423
        %503 = vmatpush.msra.mxu0 %v419
        %504 = vmatpush.msra.mxu0 %v415
        %505 = vmatpush.msra.mxu0 %v411
        %506 = vmatpush.msra.mxu0 %v407
        %507 = vmatpush.msra.mxu0 %v403
        %508 = vmatpush.msra.mxu0 %v399
        %509 = vmatpush.msra.mxu0 %v395
        %510 = vmatpush.msra.mxu0 %v391
        %511 = vmatpush.msra.mxu0 %v387
        %512 = vmatpush.msra.mxu0 %v383
        %513 = vmatpush.msra.mxu0 %v379
        %514 = vmatpush.msra.mxu0 %v375
        %515 = vmatpush.msra.mxu0 %v371
        %516 = vmatpush.msra.mxu0 %v367
        %517 = vmatmul.f32.gmra.mxu0 %v229
        %v518 = vpop.f32.mrf.mxu0
        %v519 = vadd.f32 %v493, %v518
        %520 = vmatmul.f32.gmra.mxu0 %v233
        %v521 = vpop.f32.mrf.mxu0
        %v522 = vadd.f32 %v496, %v521
        %523 = vmatmul.f32.gmra.mxu0 %v237
        %v524 = vpop.f32.mrf.mxu0
        %v525 = vadd.f32 %v499, %v524
        %526 = vdwg.mxu0
        %527 = vmatpush.msra.mxu0 0.0
        %528 = vmatpush.msra.mxu0 0.0
        %529 = vmatpush.msra.mxu0 0.0
        %530 = vmatpush.msra.mxu0 0.0
        %531 = vmatpush.msra.mxu0 0.0
        %532 = vmatpush.msra.mxu0 0.0
        %533 = vmatpush.msra.mxu0 0.0
        %534 = vmatpush.msra.mxu0 0.0
        %535 = vmatpush.msra.mxu0 0.0
        %536 = vmatpush.msra.mxu0 0.0
        %537 = vmatpush.msra.mxu0 0.0
        %538 = vmatpush.msra.mxu0 0.0
        %539 = vmatpush.msra.mxu0 0.0
        %540 = vmatpush.msra.mxu0 0.0
        %541 = vmatpush.msra.mxu0 %v435
        %542 = vmatpush.msra.mxu0 %v431
        %543 = vmatmul.f32.gmra.mxu0 %v441
        %v544 = vpop.f32.mrf.mxu0
        %v545 = vadd.f32 %v519, %v544
        %546 = vmatmul.f32.gmra.mxu0 %v444
        %v547 = vpop.f32.mrf.mxu0
        %v548 = vadd.f32 %v522, %v547
        %549 = vmatmul.f32.gmra.mxu0 %v447
        %v550 = vpop.f32.mrf.mxu0
        %v551 = vadd.f32 %v525, %v550
        %552 = vdwg.mxu0
        %553 = vmatpush.msra.mxu0 %v300
        %554 = vmatpush.msra.mxu0 %v296
        %555 = vmatpush.msra.mxu0 %v292
        %556 = vmatpush.msra.mxu0 %v288
        %557 = vmatpush.msra.mxu0 %v284
        %558 = vmatpush.msra.mxu0 %v280
        %559 = vmatpush.msra.mxu0 %v276
        %560 = vmatpush.msra.mxu0 %v272
        %561 = vmatpush.msra.mxu0 %v268
        %562 = vmatpush.msra.mxu0 %v264
        %563 = vmatpush.msra.mxu0 %v260
        %564 = vmatpush.msra.mxu0 %v256
        %565 = vmatpush.msra.mxu0 %v252
        %566 = vmatpush.msra.mxu0 %v248
        %567 = vmatpush.msra.mxu0 %v244
        %568 = vmatpush.msra.mxu0 %v240
        %569 = vmatmul.f32.gmra.mxu0 %v227
        %v570 = vpop.f32.mrf.mxu0
        %v571 = vadd.f32 0.0, %v570
        %572 = vmatmul.f32.gmra.mxu0 %v231
        %v573 = vpop.f32.mrf.mxu0
        %v574 = vadd.f32 0.0, %v573
        %575 = vmatmul.f32.gmra.mxu0 %v235
        %v576 = vpop.f32.mrf.mxu0
        %v577 = vadd.f32 0.0, %v576
        %578 = vdwg.mxu0
        %579 = vmatpush.msra.mxu0 %v364
        %580 = vmatpush.msra.mxu0 %v360
        %581 = vmatpush.msra.mxu0 %v356
        %582 = vmatpush.msra.mxu0 %v352
        %583 = vmatpush.msra.mxu0 %v348
        %584 = vmatpush.msra.mxu0 %v344
        %585 = vmatpush.msra.mxu0 %v340
        %586 = vmatpush.msra.mxu0 %v336
        %587 = vmatpush.msra.mxu0 %v332
        %588 = vmatpush.msra.mxu0 %v328
        %589 = vmatpush.msra.mxu0 %v324
        %590 = vmatpush.msra.mxu0 %v320
        %591 = vmatpush.msra.mxu0 %v316
        %592 = vmatpush.msra.mxu0 %v312
        %593 = vmatpush.msra.mxu0 %v308
        %594 = vmatpush.msra.mxu0 %v304
        %595 = vmatmul.f32.gmra.mxu0 %v228
        %v596 = vpop.f32.mrf.mxu0
        %v597 = vadd.f32 %v571, %v596
        %598 = vmatmul.f32.gmra.mxu0 %v232
        %v599 = vpop.f32.mrf.mxu0
        %v600 = vadd.f32 %v574, %v599
        %601 = vmatmul.f32.gmra.mxu0 %v236
        %v602 = vpop.f32.mrf.mxu0
        %v603 = vadd.f32 %v577, %v602
        %604 = vdwg.mxu0
        %605 = vmatpush.msra.mxu0 %v428
        %606 = vmatpush.msra.mxu0 %v424
        %607 = vmatpush.msra.mxu0 %v420
        %608 = vmatpush.msra.mxu0 %v416
        %609 = vmatpush.msra.mxu0 %v412
        %610 = vmatpush.msra.mxu0 %v408
        %611 = vmatpush.msra.mxu0 %v404
        %612 = vmatpush.msra.mxu0 %v400
        %613 = vmatpush.msra.mxu0 %v396
        %614 = vmatpush.msra.mxu0 %v392
        %615 = vmatpush.msra.mxu0 %v388
        %616 = vmatpush.msra.mxu0 %v384
        %617 = vmatpush.msra.mxu0 %v380
        %618 = vmatpush.msra.mxu0 %v376
        %619 = vmatpush.msra.mxu0 %v372
        %620 = vmatpush.msra.mxu0 %v368
        %621 = vmatmul.f32.gmra.mxu0 %v229
        %v622 = vpop.f32.mrf.mxu0
        %v623 = vadd.f32 %v597, %v622
        %624 = vmatmul.f32.gmra.mxu0 %v233
        %v625 = vpop.f32.mrf.mxu0
        %v626 = vadd.f32 %v600, %v625
        %627 = vmatmul.f32.gmra.mxu0 %v237
        %v628 = vpop.f32.mrf.mxu0
        %v629 = vadd.f32 %v603, %v628
        %630 = vdwg.mxu0
        %631 = vmatpush.msra.mxu0 0.0
        %632 = vmatpush.msra.mxu0 0.0
        %633 = vmatpush.msra.mxu0 0.0
        %634 = vmatpush.msra.mxu0 0.0
        %635 = vmatpush.msra.mxu0 0.0
        %636 = vmatpush.msra.mxu0 0.0
        %637 = vmatpush.msra.mxu0 0.0
        %638 = vmatpush.msra.mxu0 0.0
        %639 = vmatpush.msra.mxu0 0.0
        %640 = vmatpush.msra.mxu0 0.0
        %641 = vmatpush.msra.mxu0 0.0
        %642 = vmatpush.msra.mxu0 0.0
        %643 = vmatpush.msra.mxu0 0.0
        %644 = vmatpush.msra.mxu0 0.0
        %645 = vmatpush.msra.mxu0 %v436
        %646 = vmatpush.msra.mxu0 %v432
        %647 = vmatmul.f32.gmra.mxu0 %v441
        %v648 = vpop.f32.mrf.mxu0
        %v649 = vadd.f32 %v623, %v648
        %650 = vmatmul.f32.gmra.mxu0 %v444
        %v651 = vpop.f32.mrf.mxu0
        %v652 = vadd.f32 %v626, %v651
        %653 = vmatmul.f32.gmra.mxu0 %v447
        %v654 = vpop.f32.mrf.mxu0
        %v655 = vadd.f32 %v629, %v654
        %656 = vdwg.mxu0
        %657 = vmatpush.msra.mxu0 %v301
        %658 = vmatpush.msra.mxu0 %v297
        %659 = vmatpush.msra.mxu0 %v293
        %660 = vmatpush.msra.mxu0 %v289
        %661 = vmatpush.msra.mxu0 %v285
        %662 = vmatpush.msra.mxu0 %v281
        %663 = vmatpush.msra.mxu0 %v277
        %664 = vmatpush.msra.mxu0 %v273
        %665 = vmatpush.msra.mxu0 %v269
        %666 = vmatpush.msra.mxu0 %v265
        %667 = vmatpush.msra.mxu0 %v261
        %668 = vmatpush.msra.mxu0 %v257
        %669 = vmatpush.msra.mxu0 %v253
        %670 = vmatpush.msra.mxu0 %v249
        %671 = vmatpush.msra.mxu0 %v245
        %672 = vmatpush.msra.mxu0 %v241
        %673 = vmatmul.f32.gmra.mxu0 %v227
        %v674 = vpop.f32.mrf.mxu0
        %v675 = vadd.f32 0.0, %v674
        %676 = vmatmul.f32.gmra.mxu0 %v231
        %v677 = vpop.f32.mrf.mxu0
        %v678 = vadd.f32 0.0, %v677
        %679 = vmatmul.f32.gmra.mxu0 %v235
        %v680 = vpop.f32.mrf.mxu0
        %v681 = vadd.f32 0.0, %v680
        %682 = vdwg.mxu0
        %683 = vmatpush.msra.mxu0 %v365
        %684 = vmatpush.msra.mxu0 %v361
        %685 = vmatpush.msra.mxu0 %v357
        %686 = vmatpush.msra.mxu0 %v353
        %687 = vmatpush.msra.mxu0 %v349
        %688 = vmatpush.msra.mxu0 %v345
        %689 = vmatpush.msra.mxu0 %v341
        %690 = vmatpush.msra.mxu0 %v337
        %691 = vmatpush.msra.mxu0 %v333
        %692 = vmatpush.msra.mxu0 %v329
        %693 = vmatpush.msra.mxu0 %v325
        %694 = vmatpush.msra.mxu0 %v321
        %695 = vmatpush.msra.mxu0 %v317
        %696 = vmatpush.msra.mxu0 %v313
        %697 = vmatpush.msra.mxu0 %v309
        %698 = vmatpush.msra.mxu0 %v305
        %699 = vmatmul.f32.gmra.mxu0 %v228
        %v700 = vpop.f32.mrf.mxu0
        %v701 = vadd.f32 %v675, %v700
        %702 = vmatmul.f32.gmra.mxu0 %v232
        %v703 = vpop.f32.mrf.mxu0
        %v704 = vadd.f32 %v678, %v703
        %705 = vmatmul.f32.gmra.mxu0 %v236
        %v706 = vpop.f32.mrf.mxu0
        %v707 = vadd.f32 %v681, %v706
        %708 = vdwg.mxu0
        %709 = vmatpush.msra.mxu0 %v429
        %710 = vmatpush.msra.mxu0 %v425
        %711 = vmatpush.msra.mxu0 %v421
        %712 = vmatpush.msra.mxu0 %v417
        %713 = vmatpush.msra.mxu0 %v413
        %714 = vmatpush.msra.mxu0 %v409
        %715 = vmatpush.msra.mxu0 %v405
        %716 = vmatpush.msra.mxu0 %v401
        %717 = vmatpush.msra.mxu0 %v397
        %718 = vmatpush.msra.mxu0 %v393
        %719 = vmatpush.msra.mxu0 %v389
        %720 = vmatpush.msra.mxu0 %v385
        %721 = vmatpush.msra.mxu0 %v381
        %722 = vmatpush.msra.mxu0 %v377
        %723 = vmatpush.msra.mxu0 %v373
        %724 = vmatpush.msra.mxu0 %v369
        %725 = vmatmul.f32.gmra.mxu0 %v229
        %v726 = vpop.f32.mrf.mxu0
        %v727 = vadd.f32 %v701, %v726
        %728 = vmatmul.f32.gmra.mxu0 %v233
        %v729 = vpop.f32.mrf.mxu0
        %v730 = vadd.f32 %v704, %v729
        %731 = vmatmul.f32.gmra.mxu0 %v237
        %v732 = vpop.f32.mrf.mxu0
        %v733 = vadd.f32 %v707, %v732
        %734 = vdwg.mxu0
        %735 = vmatpush.msra.mxu0 0.0
        %736 = vmatpush.msra.mxu0 0.0
        %737 = vmatpush.msra.mxu0 0.0
        %738 = vmatpush.msra.mxu0 0.0
        %739 = vmatpush.msra.mxu0 0.0
        %740 = vmatpush.msra.mxu0 0.0
        %741 = vmatpush.msra.mxu0 0.0
        %742 = vmatpush.msra.mxu0 0.0
        %743 = vmatpush.msra.mxu0 0.0
        %744 = vmatpush.msra.mxu0 0.0
        %745 = vmatpush.msra.mxu0 0.0
        %746 = vmatpush.msra.mxu0 0.0
        %747 = vmatpush.msra.mxu0 0.0
        %748 = vmatpush.msra.mxu0 0.0
        %749 = vmatpush.msra.mxu0 %v437
        %750 = vmatpush.msra.mxu0 %v433
        %751 = vmatmul.f32.gmra.mxu0 %v441
        %v752 = vpop.f32.mrf.mxu0
        %v753 = vadd.f32 %v727, %v752
        %754 = vmatmul.f32.gmra.mxu0 %v444
        %v755 = vpop.f32.mrf.mxu0
        %v756 = vadd.f32 %v730, %v755
        %757 = vmatmul.f32.gmra.mxu0 %v447
        %v758 = vpop.f32.mrf.mxu0
        %v759 = vadd.f32 %v733, %v758
        %760 = vdwg.mxu0
        %761 = vmatpush.msra.mxu0 %v302
        %762 = vmatpush.msra.mxu0 %v298
        %763 = vmatpush.msra.mxu0 %v294
        %764 = vmatpush.msra.mxu0 %v290
        %765 = vmatpush.msra.mxu0 %v286
        %766 = vmatpush.msra.mxu0 %v282
        %767 = vmatpush.msra.mxu0 %v278
        %768 = vmatpush.msra.mxu0 %v274
        %769 = vmatpush.msra.mxu0 %v270
        %770 = vmatpush.msra.mxu0 %v266
        %771 = vmatpush.msra.mxu0 %v262
        %772 = vmatpush.msra.mxu0 %v258
        %773 = vmatpush.msra.mxu0 %v254
        %774 = vmatpush.msra.mxu0 %v250
        %775 = vmatpush.msra.mxu0 %v246
        %776 = vmatpush.msra.mxu0 %v242
        %777 = vmatmul.f32.gmra.mxu0 %v227
        %v778 = vpop.f32.mrf.mxu0
        %v779 = vadd.f32 0.0, %v778
        %780 = vmatmul.f32.gmra.mxu0 %v231
        %v781 = vpop.f32.mrf.mxu0
        %v782 = vadd.f32 0.0, %v781
        %783 = vmatmul.f32.gmra.mxu0 %v235
        %v784 = vpop.f32.mrf.mxu0
        %v785 = vadd.f32 0.0, %v784
        %786 = vdwg.mxu0
        %787 = vmatpush.msra.mxu0 %v366
        %788 = vmatpush.msra.mxu0 %v362
        %789 = vmatpush.msra.mxu0 %v358
        %790 = vmatpush.msra.mxu0 %v354
        %791 = vmatpush.msra.mxu0 %v350
        %792 = vmatpush.msra.mxu0 %v346
        %793 = vmatpush.msra.mxu0 %v342
        %794 = vmatpush.msra.mxu0 %v338
        %795 = vmatpush.msra.mxu0 %v334
        %796 = vmatpush.msra.mxu0 %v330
        %797 = vmatpush.msra.mxu0 %v326
        %798 = vmatpush.msra.mxu0 %v322
        %799 = vmatpush.msra.mxu0 %v318
        %800 = vmatpush.msra.mxu0 %v314
        %801 = vmatpush.msra.mxu0 %v310
        %802 = vmatpush.msra.mxu0 %v306
        %803 = vmatmul.f32.gmra.mxu0 %v228
        %v804 = vpop.f32.mrf.mxu0
        %v805 = vadd.f32 %v779, %v804
        %806 = vmatmul.f32.gmra.mxu0 %v232
        %v807 = vpop.f32.mrf.mxu0
        %v808 = vadd.f32 %v782, %v807
        %809 = vmatmul.f32.gmra.mxu0 %v236
        %v810 = vpop.f32.mrf.mxu0
        %v811 = vadd.f32 %v785, %v810
        %812 = vdwg.mxu0
        %813 = vmatpush.msra.mxu0 %v430
        %814 = vmatpush.msra.mxu0 %v426
        %815 = vmatpush.msra.mxu0 %v422
        %816 = vmatpush.msra.mxu0 %v418
        %817 = vmatpush.msra.mxu0 %v414
        %818 = vmatpush.msra.mxu0 %v410
        %819 = vmatpush.msra.mxu0 %v406
        %820 = vmatpush.msra.mxu0 %v402
        %821 = vmatpush.msra.mxu0 %v398
        %822 = vmatpush.msra.mxu0 %v394
        %823 = vmatpush.msra.mxu0 %v390
        %824 = vmatpush.msra.mxu0 %v386
        %825 = vmatpush.msra.mxu0 %v382
        %826 = vmatpush.msra.mxu0 %v378
        %827 = vmatpush.msra.mxu0 %v374
        %828 = vmatpush.msra.mxu0 %v370
        %829 = vmatmul.f32.gmra.mxu0 %v229
        %v830 = vpop.f32.mrf.mxu0
        %v831 = vadd.f32 %v805, %v830
        %832 = vmatmul.f32.gmra.mxu0 %v233
        %v833 = vpop.f32.mrf.mxu0
        %v834 = vadd.f32 %v808, %v833
        %835 = vmatmul.f32.gmra.mxu0 %v237
        %v836 = vpop.f32.mrf.mxu0
        %v837 = vadd.f32 %v811, %v836
        %838 = vdwg.mxu0
        %839 = vmatpush.msra.mxu0 0.0
        %840 = vmatpush.msra.mxu0 0.0
        %841 = vmatpush.msra.mxu0 0.0
        %842 = vmatpush.msra.mxu0 0.0
        %843 = vmatpush.msra.mxu0 0.0
        %844 = vmatpush.msra.mxu0 0.0
        %845 = vmatpush.msra.mxu0 0.0
        %846 = vmatpush.msra.mxu0 0.0
        %847 = vmatpush.msra.mxu0 0.0
        %848 = vmatpush.msra.mxu0 0.0
        %849 = vmatpush.msra.mxu0 0.0
        %850 = vmatpush.msra.mxu0 0.0
        %851 = vmatpush.msra.mxu0 0.0
        %852 = vmatpush.msra.mxu0 0.0
        %853 = vmatpush.msra.mxu0 %v438
        %854 = vmatpush.msra.mxu0 %v434
        %855 = vmatmul.f32.gmra.mxu0 %v441
        %v856 = vpop.f32.mrf.mxu0
        %v857 = vadd.f32 %v831, %v856
        %858 = vmatmul.f32.gmra.mxu0 %v444
        %v859 = vpop.f32.mrf.mxu0
        %v860 = vadd.f32 %v834, %v859
        %861 = vmatmul.f32.gmra.mxu0 %v447
        %v862 = vpop.f32.mrf.mxu0
        %v863 = vadd.f32 %v837, %v862
        %864 = vdwg.mxu0
        %v865 = vmul.f32 %v545, %v545
        %v866 = vmul.f32 %v649, %v649
        %v867 = vmul.f32 %v548, %v548
        %v868 = vmul.f32 %v652, %v652
        %v869 = vmul.f32 %v551, %v551
        %v870 = vmul.f32 %v655, %v655
        %v871 = vmul.f32 %v753, %v753
        %v872 = vmul.f32 %v857, %v857
        %v873 = vmul.f32 %v756, %v756
        %v874 = vmul.f32 %v860, %v860
        %v875 = vmul.f32 %v759, %v759
        %v876 = vmul.f32 %v863, %v863
        %v877 = vadd.f32 %v865, %v871
        %v878 = vadd.f32 %v866, %v872
        %v879 = vadd.f32 %v867, %v873
        %v880 = vadd.f32 %v868, %v874
        %v881 = vadd.f32 %v869, %v875
        %v882 = vadd.f32 %v870, %v876
        %v883 = vmax.f32 %v877, 1e-08
        %v884 = vmax.f32 %v878, 1e-08
        %v885 = vmax.f32 %v879, 1e-08
        %v886 = vmax.f32 %v880, 1e-08
        %v887 = vmax.f32 %v881, 1e-08
        %v888 = vmax.f32 %v882, 1e-08
        %v889 = vmin.f32 %v883, 1e+08
        %v890 = vmin.f32 %v884, 1e+08
        %v891 = vmin.f32 %v885, 1e+08
        %v892 = vmin.f32 %v886, 1e+08
        %v893 = vmin.f32 %v887, 1e+08
        %v894 = vmin.f32 %v888, 1e+08
        %v895 = vld [vmem:[#allocation7] sm:$0xff]
        %v896 = vld [vmem:[#allocation7 + $0x8] sm:$0xff]
        %v897 = vld [vmem:[#allocation7 + $0x10] sm:$0xff]
        %v898 = vld [vmem:[#allocation7 + $0x18] sm:$0xff]
        %v899 = vld [vmem:[#allocation7 + $0x20] sm:$0xff]
        %v900 = vld [vmem:[#allocation7 + $0x28] sm:$0xff]
        %v901 = vld [vmem:[#allocation7 + $0x30] sm:$0xff]
        %v902 = vld [vmem:[#allocation7 + $0x38] sm:$0xff]
        %v903 = vld [vmem:[#allocation7 + $0x40] sm:$0xff]
        %v904 = vld [vmem:[#allocation7 + $0x48] sm:$0xff]
        %v905 = vld [vmem:[#allocation7 + $0x50] sm:$0xff]
        %v906 = vld [vmem:[#allocation7 + $0x58] sm:$0xff]
        %v907 = vld [vmem:[#allocation7 + $0x60] sm:$0xff]
        %v908 = vld [vmem:[#allocation7 + $0x68] sm:$0xff]
        %v909 = vld [vmem:[#allocation7 + $0x70] sm:$0xff]
        %v910 = vld [vmem:[#allocation7 + $0x78] sm:$0xff]
        %v911 = vld [vmem:[#allocation7 + $0x80] sm:$0xff]
        %v912 = vld [vmem:[#allocation7 + $0x88] sm:$0xff]
        %v913 = vld [vmem:[#allocation7 + $0x90] sm:$0xff]
        %v914 = vld [vmem:[#allocation7 + $0x98] sm:$0xff]
        %v915 = vld [vmem:[#allocation7 + $0xa0] sm:$0xff]
        %v916 = vld [vmem:[#allocation7 + $0xa8] sm:$0xff]
        %v917 = vld [vmem:[#allocation7 + $0xb0] sm:$0xff]
        %v918 = vld [vmem:[#allocation7 + $0xb8] sm:$0xff]
        %v919 = vld [vmem:[#allocation7 + $0xc0] sm:$0xff]
        %v920 = vld [vmem:[#allocation7 + $0xc8] sm:$0xff]
        %v921 = vld [vmem:[#allocation7 + $0xd0] sm:$0xff]
        %v922 = vld [vmem:[#allocation7 + $0xd8] sm:$0xff]
        %v923 = vld [vmem:[#allocation7 + $0xe0] sm:$0xff]
        %v924 = vld [vmem:[#allocation7 + $0xe8] sm:$0xff]
        %v925 = vld [vmem:[#allocation7 + $0xf0] sm:$0xff]
        %v926 = vld [vmem:[#allocation7 + $0xf8] sm:$0xff]
        %927 = vmatpush.msra.mxu0 %v910
        %928 = vmatpush.msra.mxu0 %v909
        %929 = vmatpush.msra.mxu0 %v908
        %930 = vmatpush.msra.mxu0 %v907
        %931 = vmatpush.msra.mxu0 %v906
        %932 = vmatpush.msra.mxu0 %v905
        %933 = vmatpush.msra.mxu0 %v904
        %934 = vmatpush.msra.mxu0 %v903
        %935 = vmatpush.msra.mxu0 %v902
        %936 = vmatpush.msra.mxu0 %v901
        %937 = vmatpush.msra.mxu0 %v900
        %938 = vmatpush.msra.mxu0 %v899
        %939 = vmatpush.msra.mxu0 %v898
        %940 = vmatpush.msra.mxu0 %v897
        %941 = vmatpush.msra.mxu0 %v896
        %942 = vmatpush.msra.mxu0 %v895
        %943 = vmatmul.f32.gmra.mxu0 %v889
        %v944 = vpop.f32.mrf.mxu0
        %v945 = vadd.f32 0.0, %v944
        %946 = vmatmul.f32.gmra.mxu0 %v891
        %v947 = vpop.f32.mrf.mxu0
        %v948 = vadd.f32 0.0, %v947
        %949 = vmatmul.f32.gmra.mxu0 %v893
        %v950 = vpop.f32.mrf.mxu0
        %v951 = vadd.f32 0.0, %v950
        %952 = vdwg.mxu0
        %953 = vmatpush.msra.mxu0 %v926
        %954 = vmatpush.msra.mxu0 %v925
        %955 = vmatpush.msra.mxu0 %v924
        %956 = vmatpush.msra.mxu0 %v923
        %957 = vmatpush.msra.mxu0 %v922
        %958 = vmatpush.msra.mxu0 %v921
        %959 = vmatpush.msra.mxu0 %v920
        %960 = vmatpush.msra.mxu0 %v919
        %961 = vmatpush.msra.mxu0 %v918
        %962 = vmatpush.msra.mxu0 %v917
        %963 = vmatpush.msra.mxu0 %v916
        %964 = vmatpush.msra.mxu0 %v915
        %965 = vmatpush.msra.mxu0 %v914
        %966 = vmatpush.msra.mxu0 %v913
        %967 = vmatpush.msra.mxu0 %v912
        %968 = vmatpush.msra.mxu0 %v911
        %969 = vmatmul.f32.gmra.mxu0 %v890
        %v970 = vpop.f32.mrf.mxu0
        %v971 = vadd.f32 %v945, %v970
        %972 = vmatmul.f32.gmra.mxu0 %v892
        %v973 = vpop.f32.mrf.mxu0
        %v974 = vadd.f32 %v948, %v973
        %975 = vmatmul.f32.gmra.mxu0 %v894
        %v976 = vpop.f32.mrf.mxu0
        %v977 = vadd.f32 %v951, %v976
        %978 = vdwg.mxu0
        %v979 = vmax.f32 %v971, 1e-08
        %v980 = vmax.f32 %v974, 1e-08
        %v981 = vmax.f32 %v977, 1e-08
        %v982 = vmin.f32 %v979, 1e+08
        %v983 = vmin.f32 %v980, 1e+08
        %v984 = vmin.f32 %v981, 1e+08
        %v985 = vlog2.pop %v982
        %v986 = vmul.f32 %v985, 0.6931472
        %v987 = vlog2.pop %v983
        %v988 = vmul.f32 %v987, 0.6931472
        %v989 = vlog2.pop %v984
        %v990 = vmul.f32 %v989, 0.6931472
        %991 = vst [vmem:[%s224] sm:$0xff] %v986
        %992 = vst [vmem:[%s224 + $0x8] sm:$0xff] %v988
        %993 = vst [vmem:[%s224 + $0x10] sm:$0xff] %v990
        %s994 = sand.u32 %s97, 1
        %s995 = scalar_lea.sflag [#allocation4], %s994
        %s996 = sand.u32 %s97, 1
        %s997 = smul.addr %s996, 24
        %s998 = scalar_lea.vmem [#allocation8], %s997
        // Predicated region
        $region45: #{tpu_custom_call.1} parent=31 // pred_check
          %p999 = pneg %p107
        $region46: #{tpu_custom_call.1} parent=31 // pred_check_branch
          %1001 = sbr.rel (%p999) target = $region48
        $region47: #{tpu_custom_call.1} parent=31 // pred_region
          %s1002 = smul.u32 3, %s21
          %1004 = vsyncadd %s995, 0
          %s1005 = smul.addr %s1002, 8
          %s1006 = scalar_lea.hbm %s3, %s1005
          %s1007 = sshll.u32 %s998, 4
          %s1008 = int_to_ptr.vmem [resolvable:$true] %s1007
          %s1009 = sshll.u32 %s1006, 4
          %s1010 = int_to_ptr.hbm [resolvable:$true] %s1009
          %1015 = dma.vmem_to_hbm [thread:$0]  %s1008, 384, %s1010, %s995, 128, 128, 8
        $region48: #{tpu_custom_call.1} parent=31 // pred_fallthru
          _
      $region32: #{tpu_custom_call.1} parent=5 // pred_fallthru
        _
      %p1016 = scmp.le.s32.totalorder 2, %s16
      // Predicated region
      $region49: #{tpu_custom_call.1} parent=5 // pred_check
        %p1017 = pneg %p1016
      $region50: #{tpu_custom_call.1} parent=5 // pred_check_branch
        %1019 = sbr.rel (%p1017) target = $region52
      $region51: #{tpu_custom_call.1} parent=5 // pred_region
        %s1020 = ssub.s32 %s16, 2
        // Predicated region
        $region53: #{tpu_custom_call.1} parent=51 // pred_check
          %p1021 = pneg %p113
        $region54: #{tpu_custom_call.1} parent=51 // pred_check_branch
          %1023 = sbr.rel (%p1021) target = $region56
        $region55: #{tpu_custom_call.1} parent=51 // pred_region
          %s1024 = sand.u32 %s98, 1
          %s1025 = scalar_lea.sflag [#allocation4], %s1024
          %s1026 = sand.u32 %s98, 1
          %s1027 = smul.addr %s1026, 24
          %s1028 = scalar_lea.vmem [#allocation8], %s1027
          %1030 = dma.done %s1025, 384
        $region56: #{tpu_custom_call.1} parent=51 // pred_fallthru
          _
      $region52: #{tpu_custom_call.1} parent=5 // pred_fallthru
        _
    $region6: #{tpu_custom_call.1} parent=1 // loop_footer
      %s20 = sadd.s32 1, %s16
    $region7: #{tpu_custom_call.1} parent=1 // loop_footer_branch
      %15 = sbr.rel target = $region3
    $region8: #{tpu_custom_call.1} parent=1 // loop_exit
      _
    %1031 = vsyncpa [#allocation3], 1
    %s1032 = scalar_lea.sflag [#allocation3], 1
    %1033 = vsyncpa %s1032, 1
    %1034 = vsyncpa [#allocation6], 1
    %1035 = vsyncpa [#allocation4], 1
    %s1036 = scalar_lea.sflag [#allocation4], 1
    %1037 = vsyncpa %s1036, 1

</llo_original>
